<compile_context>
chip_gen: v7x
topology: tpu7x:2x2x1
jax: 0.10.0
libtpu: 0.0.40
codegen_flags: <defaults>
</compile_context>

<pallas_src>
import jax
import jax.numpy as jnp
from jax.experimental import pallas as pl
from jax.experimental.pallas import tpu as pltpu


# ----------------------------------------------------------------------------
# Symmetry sign tables (mirror the in-place torch .neg_() calls)
# ----------------------------------------------------------------------------
def _symmetry_signs():
    o_sign = jnp.ones((4, 3, 3), jnp.float32)
    o_sign = o_sign.at[0:2, :, 0].multiply(-1)     # o[:, 0:2, :, 0].neg_()
    o_sign = o_sign.at[::2, :, 1].multiply(-1)     # o[:, ::2, :, 1].neg_()
    o_sign = o_sign.at[0:2, 0].multiply(-1)        # o[:, 0:2, 0].neg_()
    o_sign = o_sign.at[::2, 1].multiply(-1)        # o[:, ::2, 1].neg_()

    w_sign = jnp.ones((4, 3), jnp.float32)
    w_sign = w_sign.at[0:2, 1].multiply(-1)
    w_sign = w_sign.at[::2, 0].multiply(-1)
    w_sign = w_sign.at[0:2, 2].multiply(-1)
    w_sign = w_sign.at[::2, 2].multiply(-1)

    dd_sign = jnp.ones((4, 2), jnp.float32)
    dd_sign = dd_sign.at[0:2, 1].multiply(-1)
    dd_sign = dd_sign.at[::2, 0].multiply(-1)

    rpy_sign = jnp.ones((4, 3), jnp.float32)
    rpy_sign = rpy_sign.at[0:2, 1].multiply(-1)
    rpy_sign = rpy_sign.at[::2, 0].multiply(-1)
    rpy_sign = rpy_sign.at[0:2, 2].multiply(-1)
    rpy_sign = rpy_sign.at[::2, 2].multiply(-1)
    return o_sign, w_sign, dd_sign, rpy_sign


# ----------------------------------------------------------------------------
# One-time weight folding: symmetry copies + signs + mean + b1 -> big matrices
# ----------------------------------------------------------------------------
_OUT_PAD = 8   # padded output lane width (>= 3); kept tiny to minimize HBM writeback


def fold_params(params, matmul_dtype=jnp.bfloat16):
    """params are torch.nn.Linear-shaped: W (out, in), b (out,)."""
    w1, b1, w2, b2, w3, b3 = [jnp.asarray(p, jnp.float32) for p in params]
    o_sign, w_sign, dd_sign, rpy_sign = _symmetry_signs()

    # per-copy input sign vector over the 16 concatenated features
    in_sign = jnp.concatenate(
        [o_sign.reshape(4, 9), w_sign, jnp.ones((4, 1), jnp.float32),
         jnp.ones((4, 1), jnp.float32), dd_sign], axis=1)              # (4, 16)

    H1 = w1.shape[0]
    H2 = w2.shape[0]

    # W1 stacked: (16, 4*H1); column block k = diag(s_k) @ W1.T.  A final row
    # carries b1 (input gets a constant-1 column), so no separate b1 add.
    w1t = w1.T                                                         # (16, H1)
    w1s = jnp.concatenate([w1t * in_sign[k][:, None] for k in range(4)], axis=1)
    b1row = jnp.tile(b1, 4)[None, :]                                   # (1, 4*H1)
    w1_aug = jnp.concatenate([w1s, b1row], axis=0)                     # (17, 4*H1)

    # W2 block-diagonal: (4*H1, 4*H2)
    w2bd = jnp.kron(jnp.eye(4, dtype=jnp.float32), w2.T)

    # W3 folded with output signs and 0.25 mean weight: (4*H2, 3) -> pad to 8
    w3t = w3.T                                                         # (H2, 3)
    w3f3 = jnp.concatenate(
        [0.25 * w3t * rpy_sign[k][None, :] for k in range(4)], axis=0)  # (4*H2, 3)
    w3f = jnp.zeros((4 * H2, _OUT_PAD), jnp.float32).at[:, :3].set(w3f3)

    # folded output bias (evaluates to exactly zero: output signs cancel)
    b3f = 0.25 * (rpy_sign.sum(axis=0) * b3)                           # (3,)

    # remaining biases (added in f32 after the f32-accumulated matmuls)
    P = max(4 * H2, _OUT_PAD, 128)
    bias_stack = jnp.zeros((2, P), jnp.float32)
    bias_stack = bias_stack.at[0, :4 * H2].set(jnp.tile(b2, 4))
    bias_stack = bias_stack.at[1, :3].set(b3f)

    return (w1_aug.astype(matmul_dtype), w2bd.astype(matmul_dtype),
            w3f.astype(matmul_dtype), bias_stack)


# ----------------------------------------------------------------------------
# Pallas kernel:
#   concat features -> (TM,17) -> bf16 @ (17,4H1) -> relu
#                   -> bf16 @ (4H1,4H2) -> +b2, relu
#                   -> bf16 @ (4H2,8)   -> +b3f, clip  (f32 everywhere else)
# ----------------------------------------------------------------------------
def policy_kernel(o_ref, w_ref, npt_ref, dt_ref, dd_ref,
                  w1_ref, w2_ref, w3_ref, b_ref, out_ref):
    tm = o_ref.shape[0]
    h2f = w2_ref.shape[1]
    outf = w3_ref.shape[1]
    mm_dtype = w1_ref.dtype

    ones = jnp.ones((tm, 1), jnp.float32)                 # b1-fold column
    x = jnp.concatenate(
        [o_ref[...], w_ref[...], npt_ref[...], dt_ref[...], dd_ref[...], ones],
        axis=1)                                           # (TM, 17) f32

    h1 = jnp.dot(x.astype(mm_dtype), w1_ref[...],
                 preferred_element_type=jnp.float32)      # (TM, 4*H1)
    h1 = jnp.maximum(h1, 0.0)                             # b1 already folded in

    h2 = jnp.dot(h1.astype(mm_dtype), w2_ref[...],
                 preferred_element_type=jnp.float32)      # (TM, 4*H2)
    h2 = jnp.maximum(h2 + b_ref[0:1, :h2f], 0.0)

    y = jnp.dot(h2.astype(mm_dtype), w3_ref[...],
                preferred_element_type=jnp.float32)       # (TM, 8)
    y = y + b_ref[1:2, :outf]
    out_ref[...] = jnp.clip(y, -1.0, 1.0)


def _round_up(x, m):
    return (x + m - 1) // m * m


def run_policy_kernel(o9, wf, npt, dt, dd, w1a, w2bd, w3f, bias_stack, tm):
    B = o9.shape[0]
    kin = w1a.shape[0]          # 17
    h1f = w1a.shape[1]          # 4*H1
    h2f = w2bd.shape[1]         # 4*H2
    outf = w3f.shape[1]         # 8
    grid = (pl.cdiv(B, tm),)    # tail block (if any) is padded/masked by Pallas
    return pl.pallas_call(
        policy_kernel,
        out_shape=jax.ShapeDtypeStruct((B, outf), jnp.float32),
        grid_spec=pltpu.PrefetchScalarGridSpec(
            num_scalar_prefetch=0,
            grid=grid,
            in_specs=[
                pl.BlockSpec((tm, 9), lambda i: (i, 0)),
                pl.BlockSpec((tm, 3), lambda i: (i, 0)),
                pl.BlockSpec((tm, 1), lambda i: (i, 0)),
                pl.BlockSpec((tm, 1), lambda i: (i, 0)),
                pl.BlockSpec((tm, 2), lambda i: (i, 0)),
                pl.BlockSpec((kin, h1f), lambda i: (0, 0)),
                pl.BlockSpec((h1f, h2f), lambda i: (0, 0)),
                pl.BlockSpec((h2f, outf), lambda i: (0, 0)),
                pl.BlockSpec(bias_stack.shape, lambda i: (0, 0)),
            ],
            out_specs=pl.BlockSpec((tm, outf), lambda i: (i, 0)),
        ),
        compiler_params=pltpu.CompilerParams(
            dimension_semantics=("parallel",)),
    )(o9, wf, npt, dt, dd, w1a, w2bd, w3f, bias_stack)


# ----------------------------------------------------------------------------
# Folded forward in plain XLA (tiny-batch fallback + tight cross-check)
# ----------------------------------------------------------------------------
def folded_forward_xla(folded, o9, wf, npt, dt, dd):
    w1a, w2bd, w3f, bias = folded
    B = o9.shape[0]
    mm = w1a.dtype
    x = jnp.concatenate([o9, wf, npt, dt, dd, jnp.ones((B, 1), jnp.float32)], axis=1)
    h1 = jnp.maximum(jnp.dot(x.astype(mm), w1a,
                             preferred_element_type=jnp.float32), 0.0)
    h2 = jnp.maximum(jnp.dot(h1.astype(mm), w2bd,
                             preferred_element_type=jnp.float32)
                     + bias[0:1, :w2bd.shape[1]], 0.0)
    y = jnp.dot(h2.astype(mm), w3f,
                preferred_element_type=jnp.float32) + bias[1:2, :w3f.shape[1]]
    return jnp.clip(y, -1.0, 1.0)[:, :3]


# ----------------------------------------------------------------------------
# Public forward: folded weights closed over (constants under jit)
# ----------------------------------------------------------------------------
def make_policy_forward(params, *, tm_max=2048, min_grid_steps=8,
                        xla_fallback_max_batch=0,
                        matmul_dtype=jnp.bfloat16):
    """xla_fallback_max_batch: batches <= this skip Pallas entirely (tiny-batch
    regime where dispatch overhead dominates). 0 = always use the kernel."""
    folded = fold_params(params, matmul_dtype)

    @jax.jit
    def forward(o, w, noPitchTime, dodgeTime, dodgeDirection):
        B = o.shape[0]
        o9 = o.reshape(B, 9).astype(jnp.float32)
        wf = w.astype(jnp.float32)
        npt = noPitchTime.reshape(B, 1).astype(jnp.float32)
        dt = dodgeTime.reshape(B, 1).astype(jnp.float32)
        dd = dodgeDirection.astype(jnp.float32)

        if B <= xla_fallback_max_batch:
            return folded_forward_xla(folded, o9, wf, npt, dt, dd)

        # Row tile: as large as possible (<= tm_max) while keeping ~min_grid_steps
        # grid steps for pipeline overlap and v7x's two TensorCores; multiple of 8.
        tm = max(8, min(tm_max, _round_up(pl.cdiv(B, min_grid_steps), 8)))
        out = run_policy_kernel(o9, wf, npt, dt, dd, *folded, tm)      # (B, 8)
        return out[:, :3]

    return forward


# ----------------------------------------------------------------------------
# Pure-JAX f32 reference (mirrors the torch module exactly)
# ----------------------------------------------------------------------------
def policy_forward_ref(params, o, w, noPitchTime, dodgeTime, dodgeDirection):
    B = o.shape[0]
    o_sign, w_sign, dd_sign, rpy_sign = _symmetry_signs()
    o4 = o[:, None, :, :] * o_sign[None]
    w4 = w[:, None, :] * w_sign[None]
    np4 = jnp.broadcast_to(noPitchTime[:, None], (B, 4))
    dt4 = jnp.broadcast_to(dodgeTime[:, None], (B, 4))
    dd4 = dodgeDirection[:, None, :] * dd_sign[None]
    N = B * 4
    flat = jnp.concatenate(
        [o4.reshape(N, 9), w4.reshape(N, 3),
         np4.reshape(N, 1), dt4.reshape(N, 1), dd4.reshape(N, 2)], axis=1)
    w1, b1, w2, b2, w3, b3 = params
    h = jnp.maximum(flat @ w1.T + b1, 0.0)
    h = jnp.maximum(h @ w2.T + b2, 0.0)
    rpy = (h @ w3.T + b3).reshape(B, 4, 3) * rpy_sign[None]
    return jnp.clip(rpy.mean(axis=1), -1.0, 1.0)


# ----------------------------------------------------------------------------
# main
# ----------------------------------------------------------------------------
if __name__ == "__main__":
    B = 2
    hidden_size = 32
    hidden_size_2 = 32

    key = jax.random.PRNGKey(0)
    keys = jax.random.split(key, 17)

    # deterministic synthetic parameters (torch.nn.Linear shapes: (out, in))
    w1 = jax.random.normal(keys[0], (hidden_size, 16), jnp.float32) * 0.2
    b1 = jax.random.normal(keys[1], (hidden_size,), jnp.float32) * 0.1
    w2 = jax.random.normal(keys[2], (hidden_size_2, hidden_size), jnp.float32) * 0.2
    b2 = jax.random.normal(keys[3], (hidden_size_2,), jnp.float32) * 0.1
    w3 = jax.random.normal(keys[4], (3, hidden_size_2), jnp.float32) * 0.2
    b3 = jax.random.normal(keys[5], (3,), jnp.float32) * 0.1
    params = (w1, b1, w2, b2, w3, b3)

    # deterministic inputs (small batch)
    o = jax.random.normal(keys[6], (B, 3, 3), jnp.float32)
    w = jax.random.normal(keys[7], (B, 3), jnp.float32)
    noPitchTime = jax.random.normal(keys[8], (B,), jnp.float32)
    dodgeTime = jax.random.normal(keys[9], (B,), jnp.float32)
    dodgeDirection = jax.random.normal(keys[10], (B, 2), jnp.float32)

    # Pallas kernel path (fallback disabled so the kernel is exercised even at B=2)
    policy_forward = make_policy_forward(params)
    # identical folded math in plain XLA (also exercises the tiny-batch fallback)
    policy_forward_xla = make_policy_forward(params, xla_fallback_max_batch=1 << 30)

    out = jax.block_until_ready(
        policy_forward(o, w, noPitchTime, dodgeTime, dodgeDirection))
    ref_f32 = policy_forward_ref(params, o, w, noPitchTime, dodgeTime, dodgeDirection)
    ref_bf16 = policy_forward_xla(o, w, noPitchTime, dodgeTime, dodgeDirection)

    assert out.shape == (B, 3)
    # kernel vs identical bf16 folded math in XLA: tight
    assert jnp.allclose(out, ref_bf16, atol=5e-3), (out, ref_bf16)
    # kernel vs exact f32 torch-semantics reference: bf16-matmul tolerance
    assert jnp.allclose(out, ref_f32, atol=5e-2), (out, ref_f32)

    # Medium batch: multi-step grid + masked tail tile path
    B2 = 300
    o2 = jax.random.normal(keys[11], (B2, 3, 3), jnp.float32)
    w2i = jax.random.normal(keys[12], (B2, 3), jnp.float32)
    np2 = jax.random.normal(keys[13], (B2,), jnp.float32)
    dt2 = jax.random.normal(keys[14], (B2,), jnp.float32)
    dd2 = jax.random.normal(keys[15], (B2, 2), jnp.float32)

    out2 = jax.block_until_ready(policy_forward(o2, w2i, np2, dt2, dd2))
    ref2 = policy_forward_ref(params, o2, w2i, np2, dt2, dd2)
    assert out2.shape == (B2, 3)
    assert jnp.allclose(out2, ref2, atol=5e-2), (out2, ref2)

    print("KERNEL_OK")
</pallas_src>

<mosaic_0001>
module attributes {stable_mosaic.version = 11 : i64} {
  func.func @policy_kernel(%arg0: i32, %arg1: memref<8x9xf32, #tpu.memory_space<vmem>>, %arg2: memref<8x3xf32, #tpu.memory_space<vmem>>, %arg3: memref<8x1xf32, #tpu.memory_space<vmem>>, %arg4: memref<8x1xf32, #tpu.memory_space<vmem>>, %arg5: memref<8x2xf32, #tpu.memory_space<vmem>>, %arg6: memref<17x128xbf16, #tpu.memory_space<vmem>>, %arg7: memref<128x128xbf16, #tpu.memory_space<vmem>>, %arg8: memref<128x8xbf16, #tpu.memory_space<vmem>>, %arg9: memref<2x128xf32, #tpu.memory_space<vmem>>, %arg10: memref<8x8xf32, #tpu.memory_space<vmem>>) attributes {dimension_semantics = [#tpu.dimension_semantics<parallel>], iteration_bounds = array<i64: 1>, scalar_prefetch = 0 : i64, scratch_operands = 0 : i64, tpu.core_type = #tpu.core_type<tc>, window_params = [{transform_indices = @transform_0, window_bounds = array<i64: 8, 9>}, {transform_indices = @transform_1, window_bounds = array<i64: 8, 3>}, {transform_indices = @transform_2, window_bounds = array<i64: 8, 1>}, {transform_indices = @transform_3, window_bounds = array<i64: 8, 1>}, {transform_indices = @transform_4, window_bounds = array<i64: 8, 2>}, {pipeline_mode = #tpu.pipeline_mode<synchronous>, transform_indices = @transform_5, window_bounds = array<i64: 17, 128>}, {pipeline_mode = #tpu.pipeline_mode<synchronous>, transform_indices = @transform_6, window_bounds = array<i64: 128, 128>}, {pipeline_mode = #tpu.pipeline_mode<synchronous>, transform_indices = @transform_7, window_bounds = array<i64: 128, 8>}, {pipeline_mode = #tpu.pipeline_mode<synchronous>, transform_indices = @transform_8, window_bounds = array<i64: 2, 128>}, {transform_indices = @transform_9, window_bounds = array<i64: 8, 8>}]} {
    %cst = arith.constant 1.000000e+00 : f32
    %0 = vector.broadcast %cst : f32 to vector<8x1xf32>
    %c0 = arith.constant 0 : index
    %c0_0 = arith.constant 0 : index
    %1 = vector.load %arg1[%c0, %c0_0] : memref<8x9xf32, #tpu.memory_space<vmem>>, vector<8x9xf32>
    %c0_1 = arith.constant 0 : index
    %c0_2 = arith.constant 0 : index
    %2 = vector.load %arg2[%c0_1, %c0_2] : memref<8x3xf32, #tpu.memory_space<vmem>>, vector<8x3xf32>
    %c0_3 = arith.constant 0 : index
    %c0_4 = arith.constant 0 : index
    %3 = vector.load %arg3[%c0_3, %c0_4] : memref<8x1xf32, #tpu.memory_space<vmem>>, vector<8x1xf32>
    %c0_5 = arith.constant 0 : index
    %c0_6 = arith.constant 0 : index
    %4 = vector.load %arg4[%c0_5, %c0_6] : memref<8x1xf32, #tpu.memory_space<vmem>>, vector<8x1xf32>
    %c0_7 = arith.constant 0 : index
    %c0_8 = arith.constant 0 : index
    %5 = vector.load %arg5[%c0_7, %c0_8] : memref<8x2xf32, #tpu.memory_space<vmem>>, vector<8x2xf32>
    %6 = tpu.concatenate %1, %2, %3, %4, %5, %0 in 1 : vector<8x9xf32>, vector<8x3xf32>, vector<8x1xf32>, vector<8x1xf32>, vector<8x2xf32>, vector<8x1xf32> -> vector<8x17xf32>
    %7 = arith.truncf %6 : vector<8x17xf32> to vector<8x17xbf16>
    %c0_9 = arith.constant 0 : index
    %c0_10 = arith.constant 0 : index
    %8 = vector.load %arg6[%c0_9, %c0_10] : memref<17x128xbf16, #tpu.memory_space<vmem>>, vector<17x128xbf16>
    %cst_11 = arith.constant dense<0.000000e+00> : vector<8x128xf32>
    %9 = tpu.matmul %7, %8, %cst_11 {dimension_numbers = #tpu.dot_dimension_numbers<[1], [0], [0], [1], [0, 0, 1, 1], [], []>} : vector<8x17xbf16>, vector<17x128xbf16>, vector<8x128xf32> -> vector<8x128xf32>
    %cst_12 = arith.constant 0.000000e+00 : f32
    %10 = vector.broadcast %cst_12 : f32 to vector<8x128xf32>
    %11 = arith.maximumf %9, %10 : vector<8x128xf32>
    %12 = arith.truncf %11 : vector<8x128xf32> to vector<8x128xbf16>
    %c0_13 = arith.constant 0 : index
    %c0_14 = arith.constant 0 : index
    %13 = vector.load %arg7[%c0_13, %c0_14] : memref<128x128xbf16, #tpu.memory_space<vmem>>, vector<128x128xbf16>
    %cst_15 = arith.constant dense<0.000000e+00> : vector<8x128xf32>
    %14 = tpu.matmul %12, %13, %cst_15 {dimension_numbers = #tpu.dot_dimension_numbers<[1], [0], [0], [1], [0, 0, 1, 1], [], []>} : vector<8x128xbf16>, vector<128x128xbf16>, vector<8x128xf32> -> vector<8x128xf32>
    %c0_16 = arith.constant 0 : index
    %c0_17 = arith.constant 0 : index
    %15 = vector.load %arg9[%c0_16, %c0_17] : memref<2x128xf32, #tpu.memory_space<vmem>>, vector<1x128xf32>
    %16 = vector.broadcast %15 : vector<1x128xf32> to vector<8x128xf32>
    %17 = arith.addf %14, %16 : vector<8x128xf32>
    %cst_18 = arith.constant 0.000000e+00 : f32
    %18 = vector.broadcast %cst_18 : f32 to vector<8x128xf32>
    %19 = arith.maximumf %17, %18 : vector<8x128xf32>
    %20 = arith.truncf %19 : vector<8x128xf32> to vector<8x128xbf16>
    %c0_19 = arith.constant 0 : index
    %c0_20 = arith.constant 0 : index
    %21 = vector.load %arg8[%c0_19, %c0_20] : memref<128x8xbf16, #tpu.memory_space<vmem>>, vector<128x8xbf16>
    %cst_21 = arith.constant dense<0.000000e+00> : vector<8x8xf32>
    %22 = tpu.matmul %20, %21, %cst_21 {dimension_numbers = #tpu.dot_dimension_numbers<[1], [0], [0], [1], [0, 0, 1, 1], [], []>} : vector<8x128xbf16>, vector<128x8xbf16>, vector<8x8xf32> -> vector<8x8xf32>
    %c1 = arith.constant 1 : index
    %c0_22 = arith.constant 0 : index
    %23 = vector.load %arg9[%c1, %c0_22] : memref<2x128xf32, #tpu.memory_space<vmem>>, vector<1x8xf32>
    %24 = vector.broadcast %23 : vector<1x8xf32> to vector<8x8xf32>
    %25 = arith.addf %22, %24 : vector<8x8xf32>
    %cst_23 = arith.constant -1.000000e+00 : f32
    %cst_24 = arith.constant 1.000000e+00 : f32
    %26 = vector.broadcast %cst_23 : f32 to vector<8x8xf32>
    %27 = arith.maximumf %26, %25 : vector<8x8xf32>
    %28 = vector.broadcast %cst_24 : f32 to vector<8x8xf32>
    %29 = arith.minimumf %28, %27 : vector<8x8xf32>
    %c0_25 = arith.constant 0 : index
    %c0_26 = arith.constant 0 : index
    %30 = vector.load %arg10[%c0_25, %c0_26] : memref<8x8xf32, #tpu.memory_space<vmem>>, vector<8x8xf32>
    tpu.vector_store %arg10[%c0_25, %c0_26], %29 {strides = array<i32>} : memref<8x8xf32, #tpu.memory_space<vmem>>, vector<8x8xf32>,
    return
  }
  func.func @transform_0(%arg0: i32) -> (i32, i32) {
    %c0_i32 = arith.constant 0 : i32
    %c0_i32_0 = arith.constant 0 : i32
    return %arg0, %c0_i32 : i32, i32
  }
  func.func @transform_1(%arg0: i32) -> (i32, i32) {
    %c0_i32 = arith.constant 0 : i32
    %c0_i32_0 = arith.constant 0 : i32
    return %arg0, %c0_i32 : i32, i32
  }
  func.func @transform_2(%arg0: i32) -> (i32, i32) {
    %c0_i32 = arith.constant 0 : i32
    %c0_i32_0 = arith.constant 0 : i32
    return %arg0, %c0_i32 : i32, i32
  }
  func.func @transform_3(%arg0: i32) -> (i32, i32) {
    %c0_i32 = arith.constant 0 : i32
    %c0_i32_0 = arith.constant 0 : i32
    return %arg0, %c0_i32 : i32, i32
  }
  func.func @transform_4(%arg0: i32) -> (i32, i32) {
    %c0_i32 = arith.constant 0 : i32
    %c0_i32_0 = arith.constant 0 : i32
    return %arg0, %c0_i32 : i32, i32
  }
  func.func @transform_5(%arg0: i32) -> (i32, i32) {
    %c0_i32 = arith.constant 0 : i32
    %c0_i32_0 = arith.constant 0 : i32
    %c0_i32_1 = arith.constant 0 : i32
    return %c0_i32, %c0_i32_0 : i32, i32
  }
  func.func @transform_6(%arg0: i32) -> (i32, i32) {
    %c0_i32 = arith.constant 0 : i32
    %c0_i32_0 = arith.constant 0 : i32
    %c0_i32_1 = arith.constant 0 : i32
    return %c0_i32, %c0_i32_0 : i32, i32
  }
  func.func @transform_7(%arg0: i32) -> (i32, i32) {
    %c0_i32 = arith.constant 0 : i32
    %c0_i32_0 = arith.constant 0 : i32
    %c0_i32_1 = arith.constant 0 : i32
    return %c0_i32, %c0_i32_0 : i32, i32
  }
  func.func @transform_8(%arg0: i32) -> (i32, i32) {
    %c0_i32 = arith.constant 0 : i32
    %c0_i32_0 = arith.constant 0 : i32
    %c0_i32_1 = arith.constant 0 : i32
    return %c0_i32, %c0_i32_0 : i32, i32
  }
  func.func @transform_9(%arg0: i32) -> (i32, i32) {
    %c0_i32 = arith.constant 0 : i32
    %c0_i32_0 = arith.constant 0 : i32
    return %arg0, %c0_i32 : i32, i32
  }
}

</mosaic_0001>

<llo_original>
// kernel: forward.1
$region0: #{forward.1}
  #allocation0 [shape = 'u32[]', space=smem, size = 0x4, offset = 0x4, fixed_abs, tag = 'smem constant byte address 0x4 - core index']
  #allocation1 [shape = 'u32[144,128]{1,0:T(1,128)}', space=vmem, size = 0x12000, scoped, tag = 'internal scratch']
  %s0 = inlined_call_operand.vmem [shape: f32[2,9], index: 0, kind: input, shape index: {}]
  %s1 = inlined_call_operand.hbm [shape: f32[2,3], index: 1, kind: input, shape index: {}]
  %s2 = inlined_call_operand.vmem [shape: f32[2,1], index: 2, kind: input, shape index: {}]
  %s3 = inlined_call_operand.vmem [shape: f32[2,1], index: 3, kind: input, shape index: {}]
  %s4 = inlined_call_operand.hbm [shape: f32[2,2], index: 4, kind: input, shape index: {}]
  %s5 = inlined_call_operand.vmem [shape: bf16[17,128], index: 5, kind: input, shape index: {}]
  %s6 = inlined_call_operand.vmem [shape: bf16[128,128], index: 6, kind: input, shape index: {}]
  %s7 = inlined_call_operand.hbm [shape: bf16[128,8], index: 7, kind: input, shape index: {}]
  %s8 = inlined_call_operand.hbm [shape: f32[2,128], index: 8, kind: input, shape index: {}]
  %s9 = inlined_call_operand.hbm [shape: f32[2,8], index: 9, kind: output, shape index: {}]
  %s10 = sld [smem:[#allocation0]]
  $region62: #{forward.1} parent=0
    _
  %s12 = ssub.s32 1, %s10
  %s13 = scalar_select 0, %s12, %s10
  $region1: #{forward.1} parent=0
    #allocation2 [shape = 'u8[4096]{0}', space=vmem, size = 0x1000, scoped, tag = 'input window, operand 1, single buffered']
    #allocation3 [shape = 's32[1]{0}', space=sflag, size = 0x4, scoped, tag = 'scoped memory for forward.1']
    #allocation4 [shape = 's32[1]{0}', space=sflag, size = 0x4, scoped, tag = 'scoped memory for forward.1']
    #allocation5 [shape = 'u8[4096]{0}', space=vmem, size = 0x1000, scoped, tag = 'input window, operand 4, single buffered']
    #allocation6 [shape = 's32[1]{0}', space=sflag, size = 0x4, scoped, tag = 'scoped memory for forward.1']
    #allocation7 [shape = 'u8[32768]{0}', space=vmem, size = 0x8000, scoped, tag = 'input window, operand 7, single buffered']
    #allocation8 [shape = 'u8[1024]{0}', space=vmem, size = 0x400, scoped, tag = 'input window, operand 8, single buffered']
    #allocation9 [shape = 's32[1]{0}', space=sflag, size = 0x4, scoped, tag = 'scoped memory for forward.1']
    #allocation10 [shape = 'u8[4096]{0}', space=vmem, size = 0x1000, scoped, tag = 'output window, operand 0, single buffered']
    %14 = vsyncpa [#allocation3], 0
    %15 = vsyncpa [#allocation6], 0
    %16 = vsyncpa [#allocation9], 0
    %17 = vsyncpa [#allocation4], 0
    // Predicated region
    $region2: #{forward.1} parent=1 // pred_check
      _
    $region3: #{forward.1} parent=1 // pred_check_branch
      %19 = sbr.rel (0) target = $region5
    $region4: #{forward.1} parent=1 // pred_region
      _
    $region5: #{forward.1} parent=1 // pred_fallthru
      _
    // Predicated region
    $region6: #{forward.1} parent=1 // pred_check
      _
    $region7: #{forward.1} parent=1 // pred_check_branch
      %21 = sbr.rel (0) target = $region9
    $region8: #{forward.1} parent=1 // pred_region
      %s23 = ssub.s32 128, 32
      %24 = vsyncadd [#allocation3], %s23
      %s25 = sshll.u32 [#allocation2], 4
      %s26 = int_to_ptr.vmem [resolvable:$true] %s25
      %31 = dma.hbm_to_vmem [thread:$0]  %s1, 32, %s26, [#allocation3], 32, 32, 2
    $region9: #{forward.1} parent=1 // pred_fallthru
      _
    // Predicated region
    $region10: #{forward.1} parent=1 // pred_check
      _
    $region11: #{forward.1} parent=1 // pred_check_branch
      %33 = sbr.rel (0) target = $region13
    $region12: #{forward.1} parent=1 // pred_region
      _
    $region13: #{forward.1} parent=1 // pred_fallthru
      _
    // Predicated region
    $region14: #{forward.1} parent=1 // pred_check
      _
    $region15: #{forward.1} parent=1 // pred_check_branch
      %35 = sbr.rel (0) target = $region17
    $region16: #{forward.1} parent=1 // pred_region
      _
    $region17: #{forward.1} parent=1 // pred_fallthru
      _
    // Predicated region
    $region18: #{forward.1} parent=1 // pred_check
      _
    $region19: #{forward.1} parent=1 // pred_check_branch
      %37 = sbr.rel (0) target = $region21
    $region20: #{forward.1} parent=1 // pred_region
      %s39 = ssub.s32 128, 32
      %40 = vsyncadd [#allocation6], %s39
      %s41 = sshll.u32 [#allocation5], 4
      %s42 = int_to_ptr.vmem [resolvable:$true] %s41
      %47 = dma.hbm_to_vmem [thread:$0]  %s4, 32, %s42, [#allocation6], 32, 32, 2
    $region21: #{forward.1} parent=1 // pred_fallthru
      _
    // Predicated region
    $region22: #{forward.1} parent=1 // pred_check
      _
    $region23: #{forward.1} parent=1 // pred_check_branch
      %49 = sbr.rel (0) target = $region25
    $region24: #{forward.1} parent=1 // pred_region
      _
    $region25: #{forward.1} parent=1 // pred_fallthru
      _
    // Predicated region
    $region26: #{forward.1} parent=1 // pred_check
      _
    $region27: #{forward.1} parent=1 // pred_check_branch
      %51 = sbr.rel (0) target = $region29
    $region28: #{forward.1} parent=1 // pred_region
      _
    $region29: #{forward.1} parent=1 // pred_fallthru
      _
    // Predicated region
    $region30: #{forward.1} parent=1 // pred_check
      _
    $region31: #{forward.1} parent=1 // pred_check_branch
      %53 = sbr.rel (0) target = $region33
    $region32: #{forward.1} parent=1 // pred_region
      %s55 = ssub.s32 1024, 1024
      %56 = vsyncadd [#allocation6], %s55
      %s57 = sshll.u32 [#allocation7], 4
      %s58 = int_to_ptr.vmem [resolvable:$true] %s57
      %63 = dma.hbm_to_vmem [thread:$0]  %s7, 1024, %s58, [#allocation6], 64, 64, 4
    $region33: #{forward.1} parent=1 // pred_fallthru
      _
    // Predicated region
    $region34: #{forward.1} parent=1 // pred_check
      _
    $region35: #{forward.1} parent=1 // pred_check_branch
      %65 = sbr.rel (0) target = $region37
    $region36: #{forward.1} parent=1 // pred_region
      %s67 = ssub.s32 32, 32
      %68 = vsyncadd [#allocation9], %s67
      %s70 = sshll.u32 [#allocation8], 4
      %s71 = int_to_ptr.vmem [resolvable:$true] %s70
      %73 = dma.hbm_to_vmem [thread:$0]  %s8, 32, %s71, [#allocation9]
    $region37: #{forward.1} parent=1 // pred_fallthru
      _
    // Predicated region
    $region38: #{forward.1} parent=1 // pred_check
      _
    $region39: #{forward.1} parent=1 // pred_check_branch
      %75 = sbr.rel (0) target = $region41
    $region40: #{forward.1} parent=1 // pred_region
      %76 = dma.done [#allocation3], 128
    $region41: #{forward.1} parent=1 // pred_fallthru
      _
    // Predicated region
    $region42: #{forward.1} parent=1 // pred_check
      _
    $region43: #{forward.1} parent=1 // pred_check_branch
      %78 = sbr.rel (0) target = $region45
    $region44: #{forward.1} parent=1 // pred_region
      %79 = dma.done [#allocation6], 128
    $region45: #{forward.1} parent=1 // pred_fallthru
      _
    // Predicated region
    $region46: #{forward.1} parent=1 // pred_check
      _
    $region47: #{forward.1} parent=1 // pred_check_branch
      %81 = sbr.rel (0) target = $region49
    $region48: #{forward.1} parent=1 // pred_region
      %82 = dma.done [#allocation6], 1024
    $region49: #{forward.1} parent=1 // pred_fallthru
      _
    // Predicated region
    $region50: #{forward.1} parent=1 // pred_check
      _
    $region51: #{forward.1} parent=1 // pred_check_branch
      %84 = sbr.rel (0) target = $region53
    $region52: #{forward.1} parent=1 // pred_region
      %85 = dma.done [#allocation9], 32
    $region53: #{forward.1} parent=1 // pred_fallthru
      _
    %v87 = vld [vmem:[%s0] sm:$0xff]
    %v88 = vld [vmem:[#allocation2] sm:$0xff]
    %v89 = vld [vmem:[%s2] sm:$0xff]
    %v90 = vld [vmem:[%s3] sm:$0xff]
    %v91 = vld [vmem:[#allocation5] sm:$0xff]
    %93 = vrot.lane.b32.xlu0 %v88, 9
    %v94 = vpop.permute.xlu0 %93
    %97 = vrot.lane.b32.xlu0 %v89, 12
    %v98 = vpop.permute.xlu0 %97
    %101 = vrot.lane.b32.xlu0 %v90, 13
    %v102 = vpop.permute.xlu0 %101
    %105 = vrot.lane.b32.xlu0 %v91, 14
    %v106 = vpop.permute.xlu0 %105
    %vm108 = vcmask 72704
    %v109 = vsel %vm108, %v87, %v94
    %vm110 = vcmask 97280
    %v111 = vsel %vm110, %v109, %v98
    %vm112 = vcmask 105472
    %v113 = vsel %vm112, %v111, %v102
    %vm114 = vcmask 113664
    %v115 = vsel %vm114, %v113, %v106
    %vm116 = vcmask 130048
    %v117 = vsel %vm116, %v115, 1.0
    %v118 = vpack.c.bf16 %v117, %v117
    %v119 = vld [vmem:[%s5] sm:$0xf]
    %v120 = vld [vmem:[%s5 + $0x4] sm:$0xf]
    %v121 = vld [vmem:[%s5 + $0x8] sm:$0x1]
    %v125 = vunpack.c.l.b16 %v119
    %v126 = vunpack.c.l.b16 %v120
    %v127 = vunpack.c.l.b16 %v121
    %v128 = vpack.c.b16 %v126, %v125
    %v129 = vpack.c.b16 %v127, %v127
    %vm131 = vcmask 138240
    %v133 = vsel %vm131, %v118, 0
    %vm135 = vcmask 1040384
    %v136 = vsel 0, 4294967295, 65535
    %v137 = vsel %vm135, %v136, 0
    %v139 = vand.u32 %v129, %v137
    %141 = vmatprep.subr.bf16.mxu0 0
    %142 = vmatpush1.bf16.msra.mxu0 %v128
    %143 = vmatprep.subr.bf16.mxu0 0
    %144 = vmatpush1.bf16.msra.mxu0 %v139
    %145 = vmatprep.subr.bf16.mxu0 0
    %146 = vmatpush1.bf16.msra.mxu0 0
    %147 = vmatprep.subr.bf16.mxu0 0
    %148 = vmatpush1.bf16.msra.mxu0 0
    %149 = vmatprep.subr.bf16.mxu0 0
    %150 = vmatpush1.bf16.msra.mxu0 0
    %151 = vmatprep.subr.bf16.mxu0 0
    %152 = vmatpush1.bf16.msra.mxu0 0
    %153 = vmatprep.subr.bf16.mxu0 0
    %154 = vmatpush1.bf16.msra.mxu0 0
    %155 = vmatprep.subr.bf16.mxu0 0
    %156 = vmatpush1.bf16.msra.mxu0 0
    %157 = vmatprep.subr.bf16.mxu0 0
    %158 = vmatpush1.bf16.msra.mxu0 0
    %159 = vmatprep.subr.bf16.mxu0 0
    %160 = vmatpush1.bf16.msra.mxu0 0
    %161 = vmatprep.subr.bf16.mxu0 0
    %162 = vmatpush1.bf16.msra.mxu0 0
    %163 = vmatprep.subr.bf16.mxu0 0
    %164 = vmatpush1.bf16.msra.mxu0 0
    %165 = vmatprep.subr.bf16.mxu0 0
    %166 = vmatpush1.bf16.msra.mxu0 0
    %167 = vmatprep.subr.bf16.mxu0 0
    %168 = vmatpush1.bf16.msra.mxu0 0
    %169 = vmatprep.subr.bf16.mxu0 0
    %170 = vmatpush1.bf16.msra.mxu0 0
    %171 = vmatprep.subr.bf16.mxu0 0
    %172 = vmatpush1.bf16.msra.mxu0 0
    %173 = vmatprep.mubr.bf16.mxu0 0
    %174 = vmatmul.mubr.bf16.gmra.mrb[0].mxu0 %v133
    %v175 = vpop.f32.mrb[0].mxu0
    %v176 = vadd.f32 0.0, %v175
    %v177 = vpop.f32.mrb[0].mxu0
    %v178 = vpop.f32.mrb[0].mxu0
    %v179 = vpop.f32.mrb[0].mxu0
    %180 = vdwg.mxu0
    %v181 = vmax.f32 %v176, 0.0
    %v182 = vpack.c.bf16 %v181, %v181
    %v183 = vld [vmem:[%s6] sm:$0xf]
    %v184 = vld [vmem:[%s6 + $0x4] sm:$0xf]
    %v185 = vld [vmem:[%s6 + $0x8] sm:$0xf]
    %v186 = vld [vmem:[%s6 + $0xc] sm:$0xf]
    %v187 = vld [vmem:[%s6 + $0x10] sm:$0xf]
    %v188 = vld [vmem:[%s6 + $0x14] sm:$0xf]
    %v189 = vld [vmem:[%s6 + $0x18] sm:$0xf]
    %v190 = vld [vmem:[%s6 + $0x1c] sm:$0xf]
    %v191 = vld [vmem:[%s6 + $0x20] sm:$0xf]
    %v192 = vld [vmem:[%s6 + $0x24] sm:$0xf]
    %v193 = vld [vmem:[%s6 + $0x28] sm:$0xf]
    %v194 = vld [vmem:[%s6 + $0x2c] sm:$0xf]
    %v195 = vld [vmem:[%s6 + $0x30] sm:$0xf]
    %v196 = vld [vmem:[%s6 + $0x34] sm:$0xf]
    %v197 = vld [vmem:[%s6 + $0x38] sm:$0xf]
    %v198 = vld [vmem:[%s6 + $0x3c] sm:$0xf]
    %v199 = vld [vmem:[#allocation8] sm:$0x1]
    %v200 = vlaneseq
    %v201 = vshrl.u32 %v200, 7
    %v202 = vsub.s32 0, %v201
    %v203 = vrot.slane %v199, %v202
    %v220 = vunpack.c.l.b16 %v183
    %v221 = vunpack.c.l.b16 %v184
    %v222 = vunpack.c.l.b16 %v185
    %v223 = vunpack.c.l.b16 %v186
    %v224 = vunpack.c.l.b16 %v187
    %v225 = vunpack.c.l.b16 %v188
    %v226 = vunpack.c.l.b16 %v189
    %v227 = vunpack.c.l.b16 %v190
    %v228 = vunpack.c.l.b16 %v191
    %v229 = vunpack.c.l.b16 %v192
    %v230 = vunpack.c.l.b16 %v193
    %v231 = vunpack.c.l.b16 %v194
    %v232 = vunpack.c.l.b16 %v195
    %v233 = vunpack.c.l.b16 %v196
    %v234 = vunpack.c.l.b16 %v197
    %v235 = vunpack.c.l.b16 %v198
    %v236 = vpack.c.b16 %v221, %v220
    %v237 = vpack.c.b16 %v223, %v222
    %v238 = vpack.c.b16 %v225, %v224
    %v239 = vpack.c.b16 %v227, %v226
    %v240 = vpack.c.b16 %v229, %v228
    %v241 = vpack.c.b16 %v231, %v230
    %v242 = vpack.c.b16 %v233, %v232
    %v243 = vpack.c.b16 %v235, %v234
    %252 = vmatprep.subr.bf16.mxu0 0
    %253 = vmatpush1.bf16.msra.mxu0 %v236
    %254 = vmatprep.subr.bf16.mxu0 0
    %255 = vmatpush1.bf16.msra.mxu0 %v237
    %256 = vmatprep.subr.bf16.mxu0 0
    %257 = vmatpush1.bf16.msra.mxu0 %v238
    %258 = vmatprep.subr.bf16.mxu0 0
    %259 = vmatpush1.bf16.msra.mxu0 %v239
    %260 = vmatprep.subr.bf16.mxu0 0
    %261 = vmatpush1.bf16.msra.mxu0 %v240
    %262 = vmatprep.subr.bf16.mxu0 0
    %263 = vmatpush1.bf16.msra.mxu0 %v241
    %264 = vmatprep.subr.bf16.mxu0 0
    %265 = vmatpush1.bf16.msra.mxu0 %v242
    %266 = vmatprep.subr.bf16.mxu0 0
    %267 = vmatpush1.bf16.msra.mxu0 %v243
    %268 = vmatprep.subr.bf16.mxu0 0
    %269 = vmatpush1.bf16.msra.mxu0 0
    %270 = vmatprep.subr.bf16.mxu0 0
    %271 = vmatpush1.bf16.msra.mxu0 0
    %272 = vmatprep.subr.bf16.mxu0 0
    %273 = vmatpush1.bf16.msra.mxu0 0
    %274 = vmatprep.subr.bf16.mxu0 0
    %275 = vmatpush1.bf16.msra.mxu0 0
    %276 = vmatprep.subr.bf16.mxu0 0
    %277 = vmatpush1.bf16.msra.mxu0 0
    %278 = vmatprep.subr.bf16.mxu0 0
    %279 = vmatpush1.bf16.msra.mxu0 0
    %280 = vmatprep.subr.bf16.mxu0 0
    %281 = vmatpush1.bf16.msra.mxu0 0
    %282 = vmatprep.subr.bf16.mxu0 0
    %283 = vmatpush1.bf16.msra.mxu0 0
    %284 = vmatprep.mubr.bf16.mxu0 0
    %285 = vmatmul.mubr.bf16.gmra.mrb[0].mxu0 %v182
    %v286 = vpop.f32.mrb[0].mxu0
    %v287 = vadd.f32 %v203, %v286
    %v288 = vpop.f32.mrb[0].mxu0
    %v289 = vpop.f32.mrb[0].mxu0
    %v290 = vpop.f32.mrb[0].mxu0
    %291 = vdwg.mxu0
    %v292 = vmax.f32 %v287, 0.0
    %v293 = vpack.c.bf16 %v292, %v292
    %v294 = vld [vmem:[#allocation7] sm:$0xf]
    %v295 = vld [vmem:[#allocation7 + $0x4] sm:$0xf]
    %v296 = vld [vmem:[#allocation7 + $0x8] sm:$0xf]
    %v297 = vld [vmem:[#allocation7 + $0xc] sm:$0xf]
    %v298 = vld [vmem:[#allocation7 + $0x10] sm:$0xf]
    %v299 = vld [vmem:[#allocation7 + $0x14] sm:$0xf]
    %v300 = vld [vmem:[#allocation7 + $0x18] sm:$0xf]
    %v301 = vld [vmem:[#allocation7 + $0x1c] sm:$0xf]
    %v302 = vld [vmem:[#allocation7 + $0x20] sm:$0xf]
    %v303 = vld [vmem:[#allocation7 + $0x24] sm:$0xf]
    %v304 = vld [vmem:[#allocation7 + $0x28] sm:$0xf]
    %v305 = vld [vmem:[#allocation7 + $0x2c] sm:$0xf]
    %v306 = vld [vmem:[#allocation7 + $0x30] sm:$0xf]
    %v307 = vld [vmem:[#allocation7 + $0x34] sm:$0xf]
    %v308 = vld [vmem:[#allocation7 + $0x38] sm:$0xf]
    %v309 = vld [vmem:[#allocation7 + $0x3c] sm:$0xf]
    %v310 = vld [vmem:[#allocation8 + $0x1] sm:$0x1]
    %v311 = vlaneseq
    %v312 = vshrl.u32 %v311, 7
    %v313 = vsub.s32 0, %v312
    %v314 = vrot.slane %v310, %v313
    %v331 = vunpack.c.l.b16 %v294
    %v332 = vunpack.c.l.b16 %v295
    %v333 = vunpack.c.l.b16 %v296
    %v334 = vunpack.c.l.b16 %v297
    %v335 = vunpack.c.l.b16 %v298
    %v336 = vunpack.c.l.b16 %v299
    %v337 = vunpack.c.l.b16 %v300
    %v338 = vunpack.c.l.b16 %v301
    %v339 = vunpack.c.l.b16 %v302
    %v340 = vunpack.c.l.b16 %v303
    %v341 = vunpack.c.l.b16 %v304
    %v342 = vunpack.c.l.b16 %v305
    %v343 = vunpack.c.l.b16 %v306
    %v344 = vunpack.c.l.b16 %v307
    %v345 = vunpack.c.l.b16 %v308
    %v346 = vunpack.c.l.b16 %v309
    %v347 = vpack.c.b16 %v332, %v331
    %v348 = vpack.c.b16 %v334, %v333
    %v349 = vpack.c.b16 %v336, %v335
    %v350 = vpack.c.b16 %v338, %v337
    %v351 = vpack.c.b16 %v340, %v339
    %v352 = vpack.c.b16 %v342, %v341
    %v353 = vpack.c.b16 %v344, %v343
    %v354 = vpack.c.b16 %v346, %v345
    %363 = vmatprep.subr.bf16.mxu0 0
    %364 = vmatpush1.bf16.msra.mxu0 %v347
    %365 = vmatprep.subr.bf16.mxu0 0
    %366 = vmatpush1.bf16.msra.mxu0 %v348
    %367 = vmatprep.subr.bf16.mxu0 0
    %368 = vmatpush1.bf16.msra.mxu0 %v349
    %369 = vmatprep.subr.bf16.mxu0 0
    %370 = vmatpush1.bf16.msra.mxu0 %v350
    %371 = vmatprep.subr.bf16.mxu0 0
    %372 = vmatpush1.bf16.msra.mxu0 %v351
    %373 = vmatprep.subr.bf16.mxu0 0
    %374 = vmatpush1.bf16.msra.mxu0 %v352
    %375 = vmatprep.subr.bf16.mxu0 0
    %376 = vmatpush1.bf16.msra.mxu0 %v353
    %377 = vmatprep.subr.bf16.mxu0 0
    %378 = vmatpush1.bf16.msra.mxu0 %v354
    %379 = vmatprep.subr.bf16.mxu0 0
    %380 = vmatpush1.bf16.msra.mxu0 0
    %381 = vmatprep.subr.bf16.mxu0 0
    %382 = vmatpush1.bf16.msra.mxu0 0
    %383 = vmatprep.subr.bf16.mxu0 0
    %384 = vmatpush1.bf16.msra.mxu0 0
    %385 = vmatprep.subr.bf16.mxu0 0
    %386 = vmatpush1.bf16.msra.mxu0 0
    %387 = vmatprep.subr.bf16.mxu0 0
    %388 = vmatpush1.bf16.msra.mxu0 0
    %389 = vmatprep.subr.bf16.mxu0 0
    %390 = vmatpush1.bf16.msra.mxu0 0
    %391 = vmatprep.subr.bf16.mxu0 0
    %392 = vmatpush1.bf16.msra.mxu0 0
    %393 = vmatprep.subr.bf16.mxu0 0
    %394 = vmatpush1.bf16.msra.mxu0 0
    %395 = vmatprep.mubr.bf16.mxu0 0
    %396 = vmatmul.mubr.bf16.gmra.mrb[0].mxu0 %v293
    %v397 = vpop.f32.mrb[0].mxu0
    %v398 = vadd.f32 %v314, %v397
    %v399 = vpop.f32.mrb[0].mxu0
    %v400 = vpop.f32.mrb[0].mxu0
    %v401 = vpop.f32.mrb[0].mxu0
    %402 = vdwg.mxu0
    %v403 = vmax.f32 %v398, -1.0
    %v404 = vmin.f32 %v403, 1.0
    %vm405 = vcmask 64512
    %406 = vst.msk [vmem:[#allocation10] sm:$0xff] %vm405, %v404
    // Predicated region
    $region54: #{forward.1} parent=1 // pred_check
      _
    $region55: #{forward.1} parent=1 // pred_check_branch
      %408 = sbr.rel (0) target = $region57
    $region56: #{forward.1} parent=1 // pred_region
      %s410 = ssub.s32 128, 32
      %411 = vsyncadd [#allocation4], %s410
      %s412 = sshll.u32 [#allocation10], 4
      %s413 = int_to_ptr.vmem [resolvable:$true] %s412
      %418 = dma.vmem_to_hbm [thread:$0]  %s413, 32, %s9, [#allocation4], 32, 32, 2
    $region57: #{forward.1} parent=1 // pred_fallthru
      _
    // Predicated region
    $region58: #{forward.1} parent=1 // pred_check
      _
    $region59: #{forward.1} parent=1 // pred_check_branch
      %420 = sbr.rel (0) target = $region61
    $region60: #{forward.1} parent=1 // pred_region
      %421 = dma.done [#allocation4], 128
    $region61: #{forward.1} parent=1 // pred_fallthru
      _
    %422 = vsyncpa [#allocation3], 1
    %423 = vsyncpa [#allocation6], 1
    %424 = vsyncpa [#allocation9], 1
    %425 = vsyncpa [#allocation4], 1

</llo_original>
